<compile_context>
chip_gen: v7x
topology: tpu7x:2x2x1
jax: 0.10.0
libtpu: 0.0.40
codegen_flags: <defaults>
</compile_context>

<pallas_src>
import functools
import math

import jax
import jax.numpy as jnp
from jax.experimental import pallas as pl
from jax.experimental.pallas import tpu as pltpu


def _round_up(x, m):
    return (x + m - 1) // m * m


def _vmem_capacity_bytes():
    """Physical VMEM of the current chip, with a conservative fallback."""
    try:
        cap = getattr(pltpu.get_tpu_info(), "vmem_capacity_bytes", None)
        if cap:
            return int(cap)
    except Exception:
        pass
    return 64 * 1024 * 1024  # v7x per-core size; safe lower bound


def _textcnn_kernel(x_ref, w_ref, b_ref, o_ref, buf_ref, run_ref, *,
                    filter_sizes, L, F, TT, D_pad, NF_pad, TB, max_k, off):
    """One (batch-tile, sequence-chunk) grid step.

    x_ref  : (TB, TT, D_pad)         current sequence chunk (compute dtype)
    w_ref  : (max_k, D_pad, NF_pad)  fused conv weights (tap-major), VMEM-pinned
    b_ref  : (1, NF_pad)             fused bias (f32), VMEM-pinned
    o_ref  : (TB, 1, NF_pad)         pooled output (written on the last chunk)
    buf_ref: (TB, off + TT, D_pad)   staging buffer: [ ... | halo carry | chunk ]
    run_ref: (TB, NF_pad)            running max of raw conv scores (f32)
    """
    c = pl.program_id(1)
    halo = max_k - 1

    @pl.when(c == 0)
    def _init():
        run_ref[...] = jnp.full(run_ref.shape, -jnp.inf, run_ref.dtype)
        if halo > 0:
            buf_ref[:, :off, :] = jnp.zeros((TB, off, D_pad), buf_ref.dtype)

    # Stage the current chunk at a sublane-aligned offset; rows [off-halo, off)
    # still hold the tail of the previous chunk (the halo carry).
    buf_ref[:, off:off + TT, :] = x_ref[...]

    # Raw conv scores for the TT window starts of this chunk:
    #   score[s, col] = sum_i x[t(s)+i, :] @ W[i, :, col],  t(s) = c*TT - halo + s
    # One MXU contraction per tap, N = NF_pad wide (all filter sizes fused).
    acc = jnp.zeros((TB * TT, NF_pad), jnp.float32)
    for i in range(max_k):                               # small static unroll
        s0 = off - halo + i
        xi = buf_ref[:, s0:s0 + TT, :]                   # static ref slice
        acc = acc + jnp.dot(xi.reshape(TB * TT, D_pad), w_ref[i],
                            preferred_element_type=jnp.float32)

    # Mask window starts that are out of range for each filter-size group.
    # Bias + ReLU are deferred, so invalid positions must be -inf (not 0).
    lane = jax.lax.broadcasted_iota(jnp.int32, (TT, NF_pad), 1)
    t_lim = jnp.full((TT, NF_pad), L, jnp.int32)         # padded lanes: always valid
    for j, k in enumerate(filter_sizes):
        grp = (lane >= j * F) & (lane < (j + 1) * F)
        t_lim = jnp.where(grp, L - k + 1, t_lim)
    t_ids = jax.lax.broadcasted_iota(jnp.int32, (TT, NF_pad), 0) + (c * TT - halo)
    valid = (t_ids >= 0) & (t_ids < t_lim)               # (TT, NF_pad)

    acc = jnp.where(valid[None, :, :], acc.reshape(TB, TT, NF_pad), -jnp.inf)
    run_ref[...] = jnp.maximum(run_ref[...], jnp.max(acc, axis=1))

    # Carry the last `halo` rows of this chunk for the next chunk's windows.
    if halo > 0:
        buf_ref[:, off - halo:off, :] = buf_ref[:, off + TT - halo:off + TT, :]

    # Epilogue: relu(max_t(score) + bias) == max_t(relu(score + bias)).
    @pl.when(c == pl.num_programs(1) - 1)
    def _finalize():
        res = jnp.maximum(run_ref[...] + b_ref[...], 0.0)
        o_ref[...] = res.reshape(TB, 1, NF_pad).astype(o_ref.dtype)


def textcnn_forward(x, weights, biases, filter_sizes, *,
                    t_chunk=128, batch_tile=8, compute_dtype=jnp.bfloat16):
    """TextCNN forward.

    x          : (B, L, D) float32 embeddings
    weights[i] : (F, k_i, D)  (torch Conv2d weight with the in-channel squeezed)
    biases[i]  : (F,)
    Returns (B, F * len(filter_sizes)), matching torch.cat([...], dim=1).

    compute_dtype=bfloat16 (default) halves x DMA / VMEM and doubles MXU rate on
    v6e/v7x; accumulation and the bias/ReLU/max epilogue stay in float32.
    """
    B, L, D = x.shape
    F = int(weights[0].shape[0])
    filter_sizes = tuple(int(k) for k in filter_sizes)
    n_k = len(filter_sizes)
    max_k, min_k = max(filter_sizes), min(filter_sizes)
    halo = max_k - 1
    off = _round_up(halo, 8) if halo > 0 else 0          # aligned chunk offset in buf

    D_pad = _round_up(D, 128)                            # lane-dense contraction dim
    NF = n_k * F
    NF_pad = _round_up(NF, 128)                          # lane-dense fused output dim

    # Sequence chunking: each grid step computes TT window starts.
    span = L + max_k - min_k                             # total starts incl. halo shift
    TT = min(_round_up(t_chunk, 8), _round_up(span, 8))
    TT = max(TT, _round_up(max_k, 8))
    n_chunks = -(-span // TT)
    L_pad = n_chunks * TT

    # Batch tiling: keep >= 2 batch tiles whenever B >= 2 (v7x 2-TC megacore
    # shards the leading "parallel" grid axis).
    TB = max(1, min(batch_tile, B // 2)) if B >= 2 else 1
    B_pad = _round_up(B, TB)

    # Pad x only as much as needed (B -> tile, L -> chunk multiple, D -> 128 lanes).
    x_c = x.astype(compute_dtype)
    pads = ((0, B_pad - B), (0, L_pad - L), (0, D_pad - D))
    if any(p[1] for p in pads):
        x_c = jnp.pad(x_c, pads)

    # Fuse all filter sizes: (max_k, D_pad, NF_pad) weight (taps >= k_j are zero),
    # column group j occupies [j*F, (j+1)*F); single zero-pad of NF to 128.
    w_fused = jnp.zeros((max_k, D_pad, NF_pad), compute_dtype)
    b_fused = jnp.zeros((1, NF_pad), jnp.float32)
    for j, (w, b, k) in enumerate(zip(weights, biases, filter_sizes)):
        w_kdf = jnp.transpose(w, (1, 2, 0)).astype(compute_dtype)    # (k, D, F)
        w_fused = w_fused.at[:k, :D, j * F:(j + 1) * F].set(w_kdf)
        b_fused = b_fused.at[0, j * F:(j + 1) * F].set(b.astype(jnp.float32))

    kernel = functools.partial(
        _textcnn_kernel, filter_sizes=filter_sizes, L=L, F=F, TT=TT,
        D_pad=D_pad, NF_pad=NF_pad, TB=TB, max_k=max_k, off=off)

    # Shape- and generation-aware VMEM limit: double-buffered blocks + scratch + temps.
    itemsize = jnp.dtype(compute_dtype).itemsize
    blocks = (TB * TT * D_pad * itemsize               # x chunk
              + max_k * D_pad * NF_pad * itemsize      # fused weight (pinned)
              + NF_pad * 4                             # bias
              + TB * NF_pad * 4)                       # output block
    scratch = TB * (off + TT) * D_pad * itemsize + TB * NF_pad * 4
    temps = 3 * TB * TT * NF_pad * 4                   # acc / mask / reduce temporaries
    needed = 2 * blocks + scratch + temps
    vmem_limit = int(min(max(2 * needed, 16 << 20),
                         _vmem_capacity_bytes() - (8 << 20)))

    out = pl.pallas_call(
        kernel,
        out_shape=jax.ShapeDtypeStruct((B_pad, 1, NF_pad), jnp.float32),
        grid_spec=pltpu.PrefetchScalarGridSpec(
            num_scalar_prefetch=0,
            grid=(B_pad // TB, n_chunks),
            in_specs=[
                pl.BlockSpec((TB, TT, D_pad), lambda i, c: (i, c, 0)),
                # Constant index_map -> fused weight / bias stay resident in VMEM.
                pl.BlockSpec((max_k, D_pad, NF_pad), lambda i, c: (0, 0, 0)),
                pl.BlockSpec((1, NF_pad), lambda i, c: (0, 0)),
            ],
            out_specs=pl.BlockSpec((TB, 1, NF_pad), lambda i, c: (i, 0, 0)),
            scratch_shapes=[
                pltpu.VMEM((TB, off + TT, D_pad), compute_dtype),   # halo + chunk buf
                pltpu.VMEM((TB, NF_pad), jnp.float32),              # running raw-score max
            ],
        ),
        compiler_params=pltpu.CompilerParams(
            dimension_semantics=("parallel", "arbitrary"),
            vmem_limit_bytes=vmem_limit,
        ),
    )(x_c, w_fused, b_fused)

    # Strip batch / lane padding; group order already matches torch.cat([...], 1).
    return out[:B, 0, :NF]


def textcnn_reference(x, weights, biases, filter_sizes):
    """Pure-JAX reference (different code path) for verification."""
    outs = []
    L = x.shape[1]
    for w, b, k in zip(weights, biases, filter_sizes):
        T = L - k + 1
        acc = sum(
            jnp.einsum("btd,fd->btf", x[:, i:i + T, :], w[:, i, :])
            for i in range(k)
        ) + b[None, None, :]
        outs.append(jnp.max(jax.nn.relu(acc), axis=1))
    return jnp.concatenate(outs, axis=1)


if __name__ == "__main__":
    # Small, deterministic config consistent with the module.
    B, L, D = 2, 16, 32            # batch, seq_len, input_dim (embedding)
    num_filters = 8
    filter_sizes = (2, 3, 4)

    key = jax.random.PRNGKey(0)
    kx, *kws = jax.random.split(key, 1 + 2 * len(filter_sizes))
    x = jax.random.normal(kx, (B, L, D), dtype=jnp.float32)

    weights, biases = [], []
    for i, k in enumerate(filter_sizes):
        kw, kb = kws[2 * i], kws[2 * i + 1]
        bound = 1.0 / math.sqrt(1 * k * D)   # mimic torch Conv2d default init
        weights.append(jax.random.uniform(kw, (num_filters, k, D),
                                          minval=-bound, maxval=bound,
                                          dtype=jnp.float32))
        biases.append(jax.random.uniform(kb, (num_filters,),
                                         minval=-bound, maxval=bound,
                                         dtype=jnp.float32))

    ref = textcnn_reference(x, weights, biases, filter_sizes)

    # f32 path (single sequence chunk).
    out = jax.block_until_ready(
        textcnn_forward(x, weights, biases, filter_sizes,
                        compute_dtype=jnp.float32))
    assert out.shape == (B, num_filters * len(filter_sizes)), out.shape
    assert jnp.allclose(out, ref, atol=1e-4, rtol=1e-4), "f32 mismatch vs reference"

    # f32 path with several sequence chunks (exercises halo carry + grid axis).
    out_chunked = jax.block_until_ready(
        textcnn_forward(x, weights, biases, filter_sizes,
                        t_chunk=8, compute_dtype=jnp.float32))
    assert jnp.allclose(out_chunked, ref, atol=1e-4, rtol=1e-4), "chunked mismatch"

    # Default bf16 compute path (looser tolerance: x / weights are quantized).
    out_bf16 = jax.block_until_ready(
        textcnn_forward(x, weights, biases, filter_sizes))
    assert jnp.allclose(out_bf16, ref, atol=5e-2, rtol=5e-2), "bf16 mismatch"

    print("KERNEL_OK")
</pallas_src>

<mosaic_0001>
module attributes {stable_mosaic.version = 11 : i64} {
  func.func @_textcnn_kernel(%arg0: i32, %arg1: i32, %arg2: memref<1x24x128xf32, #tpu.memory_space<vmem>>, %arg3: memref<4x128x128xf32, #tpu.memory_space<vmem>>, %arg4: memref<1x128xf32, #tpu.memory_space<vmem>>, %arg5: memref<1x1x128xf32, #tpu.memory_space<vmem>>, %arg6: memref<1x32x128xf32, #tpu.memory_space<vmem>>, %arg7: memref<1x128xf32, #tpu.memory_space<vmem>>) attributes {dimension_semantics = [#tpu.dimension_semantics<parallel>, #tpu.dimension_semantics<arbitrary>], iteration_bounds = array<i64: 2, 1>, scalar_prefetch = 0 : i64, scratch_operands = 2 : i64, tpu.core_type = #tpu.core_type<tc>, window_params = [{transform_indices = @transform_0, window_bounds = array<i64: 1, 24, 128>}, {pipeline_mode = #tpu.pipeline_mode<synchronous>, transform_indices = @transform_1, window_bounds = array<i64: 4, 128, 128>}, {pipeline_mode = #tpu.pipeline_mode<synchronous>, transform_indices = @transform_2, window_bounds = array<i64: 1, 128>}, {transform_indices = @transform_3, window_bounds = array<i64: 1, 1, 128>}]} {
    %c0_i32 = arith.constant 0 : i32
    %0 = arith.cmpi eq, %arg1, %c0_i32 : i32
    %1 = arith.extui %0 : i1 to i32
    %c0_i32_0 = arith.constant 0 : i32
    %2 = arith.cmpi ne, %1, %c0_i32_0 : i32
    scf.if %2 {
      %cst_46 = arith.constant 0xFF800000 : f32
      %75 = vector.broadcast %cst_46 : f32 to vector<1x128xf32>
      %c0_47 = arith.constant 0 : index
      %c0_48 = arith.constant 0 : index
      %76 = vector.load %arg7[%c0_47, %c0_48] : memref<1x128xf32, #tpu.memory_space<vmem>>, vector<1x128xf32>
      tpu.vector_store %arg7[%c0_47, %c0_48], %75 {strides = array<i32>} : memref<1x128xf32, #tpu.memory_space<vmem>>, vector<1x128xf32>,
      %cst_49 = arith.constant 0.000000e+00 : f32
      %77 = vector.broadcast %cst_49 : f32 to vector<1x8x128xf32>
      %c0_50 = arith.constant 0 : index
      %c0_51 = arith.constant 0 : index
      %c0_52 = arith.constant 0 : index
      %78 = vector.load %arg6[%c0_50, %c0_51, %c0_52] : memref<1x32x128xf32, #tpu.memory_space<vmem>>, vector<1x8x128xf32>
      tpu.vector_store %arg6[%c0_50, %c0_51, %c0_52], %77 {strides = array<i32>} : memref<1x32x128xf32, #tpu.memory_space<vmem>>, vector<1x8x128xf32>,
    } else {
    }
    %c0 = arith.constant 0 : index
    %c0_1 = arith.constant 0 : index
    %c0_2 = arith.constant 0 : index
    %3 = vector.load %arg2[%c0, %c0_1, %c0_2] : memref<1x24x128xf32, #tpu.memory_space<vmem>>, vector<1x24x128xf32>
    %c0_3 = arith.constant 0 : index
    %c8 = arith.constant 8 : index
    %c0_4 = arith.constant 0 : index
    %4 = vector.load %arg6[%c0_3, %c8, %c0_4] : memref<1x32x128xf32, #tpu.memory_space<vmem>>, vector<1x24x128xf32>
    tpu.vector_store %arg6[%c0_3, %c8, %c0_4], %3 {strides = array<i32>} : memref<1x32x128xf32, #tpu.memory_space<vmem>>, vector<1x24x128xf32>,
    %cst = arith.constant 0.000000e+00 : f32
    %5 = vector.broadcast %cst : f32 to vector<24x128xf32>
    %c0_5 = arith.constant 0 : index
    %c5 = arith.constant 5 : index
    %c0_6 = arith.constant 0 : index
    %6 = vector.load %arg6[%c0_5, %c5, %c0_6] : memref<1x32x128xf32, #tpu.memory_space<vmem>>, vector<1x24x128xf32>
    %7 = vector.shape_cast %6 : vector<1x24x128xf32> to vector<24x128xf32>
    %c0_7 = arith.constant 0 : index
    %c0_8 = arith.constant 0 : index
    %c0_9 = arith.constant 0 : index
    %8 = vector.load %arg3[%c0_7, %c0_8, %c0_9] : memref<4x128x128xf32, #tpu.memory_space<vmem>>, vector<1x128x128xf32>
    %9 = vector.shape_cast %8 : vector<1x128x128xf32> to vector<128x128xf32>
    %cst_10 = arith.constant dense<0.000000e+00> : vector<24x128xf32>
    %10 = tpu.matmul %7, %9, %cst_10 {dimension_numbers = #tpu.dot_dimension_numbers<[1], [0], [0], [1], [0, 0, 1, 1], [], []>} : vector<24x128xf32>, vector<128x128xf32>, vector<24x128xf32> -> vector<24x128xf32>
    %11 = arith.addf %5, %10 : vector<24x128xf32>
    %c0_11 = arith.constant 0 : index
    %c6 = arith.constant 6 : index
    %c0_12 = arith.constant 0 : index
    %12 = vector.load %arg6[%c0_11, %c6, %c0_12] : memref<1x32x128xf32, #tpu.memory_space<vmem>>, vector<1x24x128xf32>
    %13 = vector.shape_cast %12 : vector<1x24x128xf32> to vector<24x128xf32>
    %c1 = arith.constant 1 : index
    %c0_13 = arith.constant 0 : index
    %c0_14 = arith.constant 0 : index
    %14 = vector.load %arg3[%c1, %c0_13, %c0_14] : memref<4x128x128xf32, #tpu.memory_space<vmem>>, vector<1x128x128xf32>
    %15 = vector.shape_cast %14 : vector<1x128x128xf32> to vector<128x128xf32>
    %cst_15 = arith.constant dense<0.000000e+00> : vector<24x128xf32>
    %16 = tpu.matmul %13, %15, %cst_15 {dimension_numbers = #tpu.dot_dimension_numbers<[1], [0], [0], [1], [0, 0, 1, 1], [], []>} : vector<24x128xf32>, vector<128x128xf32>, vector<24x128xf32> -> vector<24x128xf32>
    %17 = arith.addf %11, %16 : vector<24x128xf32>
    %c0_16 = arith.constant 0 : index
    %c7 = arith.constant 7 : index
    %c0_17 = arith.constant 0 : index
    %18 = vector.load %arg6[%c0_16, %c7, %c0_17] : memref<1x32x128xf32, #tpu.memory_space<vmem>>, vector<1x24x128xf32>
    %19 = vector.shape_cast %18 : vector<1x24x128xf32> to vector<24x128xf32>
    %c2 = arith.constant 2 : index
    %c0_18 = arith.constant 0 : index
    %c0_19 = arith.constant 0 : index
    %20 = vector.load %arg3[%c2, %c0_18, %c0_19] : memref<4x128x128xf32, #tpu.memory_space<vmem>>, vector<1x128x128xf32>
    %21 = vector.shape_cast %20 : vector<1x128x128xf32> to vector<128x128xf32>
    %cst_20 = arith.constant dense<0.000000e+00> : vector<24x128xf32>
    %22 = tpu.matmul %19, %21, %cst_20 {dimension_numbers = #tpu.dot_dimension_numbers<[1], [0], [0], [1], [0, 0, 1, 1], [], []>} : vector<24x128xf32>, vector<128x128xf32>, vector<24x128xf32> -> vector<24x128xf32>
    %23 = arith.addf %17, %22 : vector<24x128xf32>
    %c0_21 = arith.constant 0 : index
    %c8_22 = arith.constant 8 : index
    %c0_23 = arith.constant 0 : index
    %24 = vector.load %arg6[%c0_21, %c8_22, %c0_23] : memref<1x32x128xf32, #tpu.memory_space<vmem>>, vector<1x24x128xf32>
    %25 = vector.shape_cast %24 : vector<1x24x128xf32> to vector<24x128xf32>
    %c3 = arith.constant 3 : index
    %c0_24 = arith.constant 0 : index
    %c0_25 = arith.constant 0 : index
    %26 = vector.load %arg3[%c3, %c0_24, %c0_25] : memref<4x128x128xf32, #tpu.memory_space<vmem>>, vector<1x128x128xf32>
    %27 = vector.shape_cast %26 : vector<1x128x128xf32> to vector<128x128xf32>
    %cst_26 = arith.constant dense<0.000000e+00> : vector<24x128xf32>
    %28 = tpu.matmul %25, %27, %cst_26 {dimension_numbers = #tpu.dot_dimension_numbers<[1], [0], [0], [1], [0, 0, 1, 1], [], []>} : vector<24x128xf32>, vector<128x128xf32>, vector<24x128xf32> -> vector<24x128xf32>
    %29 = arith.addf %23, %28 : vector<24x128xf32>
    %30 = tpu.iota {dimensions = array<i32: 1>} : vector<24x128xi32>
    %c16_i32 = arith.constant 16 : i32
    %31 = vector.broadcast %c16_i32 : i32 to vector<24x128xi32>
    %c0_i32_27 = arith.constant 0 : i32
    %32 = vector.broadcast %c0_i32_27 : i32 to vector<24x128xi32>
    %33 = arith.cmpi sge, %30, %32 : vector<24x128xi32>
    %c8_i32 = arith.constant 8 : i32
    %34 = vector.broadcast %c8_i32 : i32 to vector<24x128xi32>
    %35 = arith.cmpi slt, %30, %34 : vector<24x128xi32>
    %36 = arith.andi %33, %35 : vector<24x128xi1>
    %c15_i32 = arith.constant 15 : i32
    %37 = vector.broadcast %c15_i32 : i32 to vector<24x128xi32>
    %38 = arith.select %36, %37, %31 : vector<24x128xi1>, vector<24x128xi32>
    %c8_i32_28 = arith.constant 8 : i32
    %39 = vector.broadcast %c8_i32_28 : i32 to vector<24x128xi32>
    %40 = arith.cmpi sge, %30, %39 : vector<24x128xi32>
    %c16_i32_29 = arith.constant 16 : i32
    %41 = vector.broadcast %c16_i32_29 : i32 to vector<24x128xi32>
    %42 = arith.cmpi slt, %30, %41 : vector<24x128xi32>
    %43 = arith.andi %40, %42 : vector<24x128xi1>
    %c14_i32 = arith.constant 14 : i32
    %44 = vector.broadcast %c14_i32 : i32 to vector<24x128xi32>
    %45 = arith.select %43, %44, %38 : vector<24x128xi1>, vector<24x128xi32>
    %c16_i32_30 = arith.constant 16 : i32
    %46 = vector.broadcast %c16_i32_30 : i32 to vector<24x128xi32>
    %47 = arith.cmpi sge, %30, %46 : vector<24x128xi32>
    %c24_i32 = arith.constant 24 : i32
    %48 = vector.broadcast %c24_i32 : i32 to vector<24x128xi32>
    %49 = arith.cmpi slt, %30, %48 : vector<24x128xi32>
    %50 = arith.andi %47, %49 : vector<24x128xi1>
    %c13_i32 = arith.constant 13 : i32
    %51 = vector.broadcast %c13_i32 : i32 to vector<24x128xi32>
    %52 = arith.select %50, %51, %45 : vector<24x128xi1>, vector<24x128xi32>
    %53 = tpu.iota {dimensions = array<i32: 0>} : vector<24x128xi32>
    %c24_i32_31 = arith.constant 24 : i32
    %54 = arith.muli %arg1, %c24_i32_31 : i32
    %c3_i32 = arith.constant 3 : i32
    %55 = arith.subi %54, %c3_i32 : i32
    %56 = vector.broadcast %55 : i32 to vector<24x128xi32>
    %57 = arith.addi %53, %56 : vector<24x128xi32>
    %c0_i32_32 = arith.constant 0 : i32
    %58 = vector.broadcast %c0_i32_32 : i32 to vector<24x128xi32>
    %59 = arith.cmpi sge, %57, %58 : vector<24x128xi32>
    %60 = arith.cmpi slt, %57, %52 : vector<24x128xi32>
    %61 = arith.andi %59, %60 : vector<24x128xi1>
    %62 = vector.shape_cast %61 : vector<24x128xi1> to vector<1x24x128xi1>
    %63 = vector.shape_cast %29 : vector<24x128xf32> to vector<1x24x128xf32>
    %cst_33 = arith.constant 0xFF800000 : f32
    %64 = vector.broadcast %cst_33 : f32 to vector<1x24x128xf32>
    %65 = arith.select %62, %63, %64 : vector<1x24x128xi1>, vector<1x24x128xf32>
    %c0_34 = arith.constant 0 : index
    %c0_35 = arith.constant 0 : index
    %66 = vector.load %arg7[%c0_34, %c0_35] : memref<1x128xf32, #tpu.memory_space<vmem>>, vector<1x128xf32>
    %cst_36 = arith.constant dense<0xFF800000> : vector<1x128xf32>
    %67 = vector.multi_reduction <maximumf>, %65, %cst_36 [1] : vector<1x24x128xf32> to vector<1x128xf32>
    %68 = arith.maximumf %66, %67 : vector<1x128xf32>
    %c0_37 = arith.constant 0 : index
    %c0_38 = arith.constant 0 : index
    %69 = vector.load %arg7[%c0_37, %c0_38] : memref<1x128xf32, #tpu.memory_space<vmem>>, vector<1x128xf32>
    tpu.vector_store %arg7[%c0_37, %c0_38], %68 {strides = array<i32>} : memref<1x128xf32, #tpu.memory_space<vmem>>, vector<1x128xf32>,
    %c0_39 = arith.constant 0 : index
    %c29 = arith.constant 29 : index
    %c0_40 = arith.constant 0 : index
    %70 = vector.load %arg6[%c0_39, %c29, %c0_40] : memref<1x32x128xf32, #tpu.memory_space<vmem>>, vector<1x3x128xf32>
    %c0_41 = arith.constant 0 : index
    %c5_42 = arith.constant 5 : index
    %c0_43 = arith.constant 0 : index
    %71 = vector.load %arg6[%c0_41, %c5_42, %c0_43] : memref<1x32x128xf32, #tpu.memory_space<vmem>>, vector<1x3x128xf32>
    tpu.vector_store %arg6[%c0_41, %c5_42, %c0_43], %70 {strides = array<i32>} : memref<1x32x128xf32, #tpu.memory_space<vmem>>, vector<1x3x128xf32>,
    %c0_i32_44 = arith.constant 0 : i32
    %72 = arith.cmpi eq, %arg1, %c0_i32_44 : i32
    %73 = arith.extui %72 : i1 to i32
    %c0_i32_45 = arith.constant 0 : i32
    %74 = arith.cmpi ne, %73, %c0_i32_45 : i32
    scf.if %74 {
      %c0_46 = arith.constant 0 : index
      %c0_47 = arith.constant 0 : index
      %75 = vector.load %arg7[%c0_46, %c0_47] : memref<1x128xf32, #tpu.memory_space<vmem>>, vector<1x128xf32>
      %c0_48 = arith.constant 0 : index
      %c0_49 = arith.constant 0 : index
      %76 = vector.load %arg4[%c0_48, %c0_49] : memref<1x128xf32, #tpu.memory_space<vmem>>, vector<1x128xf32>
      %77 = arith.addf %75, %76 : vector<1x128xf32>
      %cst_50 = arith.constant 0.000000e+00 : f32
      %78 = vector.broadcast %cst_50 : f32 to vector<1x128xf32>
      %79 = arith.maximumf %77, %78 : vector<1x128xf32>
      %80 = vector.shape_cast %79 : vector<1x128xf32> to vector<1x1x128xf32>
      %c0_51 = arith.constant 0 : index
      %c0_52 = arith.constant 0 : index
      %c0_53 = arith.constant 0 : index
      %81 = vector.load %arg5[%c0_51, %c0_52, %c0_53] : memref<1x1x128xf32, #tpu.memory_space<vmem>>, vector<1x1x128xf32>
      tpu.vector_store %arg5[%c0_51, %c0_52, %c0_53], %80 {strides = array<i32>} : memref<1x1x128xf32, #tpu.memory_space<vmem>>, vector<1x1x128xf32>,
    } else {
    }
    return
  }
  func.func @transform_0(%arg0: i32, %arg1: i32) -> (i32, i32, i32) {
    %c0_i32 = arith.constant 0 : i32
    %c0_i32_0 = arith.constant 0 : i32
    return %arg0, %arg1, %c0_i32 : i32, i32, i32
  }
  func.func @transform_1(%arg0: i32, %arg1: i32) -> (i32, i32, i32) {
    %c0_i32 = arith.constant 0 : i32
    %c0_i32_0 = arith.constant 0 : i32
    %c0_i32_1 = arith.constant 0 : i32
    %c0_i32_2 = arith.constant 0 : i32
    return %c0_i32, %c0_i32_0, %c0_i32_1 : i32, i32, i32
  }
  func.func @transform_2(%arg0: i32, %arg1: i32) -> (i32, i32) {
    %c0_i32 = arith.constant 0 : i32
    %c0_i32_0 = arith.constant 0 : i32
    %c0_i32_1 = arith.constant 0 : i32
    return %c0_i32, %c0_i32_0 : i32, i32
  }
  func.func @transform_3(%arg0: i32, %arg1: i32) -> (i32, i32, i32) {
    %c0_i32 = arith.constant 0 : i32
    %c0_i32_0 = arith.constant 0 : i32
    %c0_i32_1 = arith.constant 0 : i32
    return %arg0, %c0_i32, %c0_i32_0 : i32, i32, i32
  }
}

</mosaic_0001>

<llo_original>
// kernel: tpu_custom_call.1
$region0: #{tpu_custom_call.1}
  #allocation0 [shape = 'u32[]', space=smem, size = 0x4, offset = 0x4, fixed_abs, tag = 'smem constant byte address 0x4 - core index']
  #allocation1 [shape = 'u32[144,128]{1,0:T(1,128)}', space=vmem, size = 0x12000, scoped, tag = 'internal scratch']
  #allocation2 [shape = 'f32[1,32,128]{2,1,0:T(8,128)}', space=vmem, size = 0x4000, scoped, tag = 'scratch operand']
  #allocation3 [shape = 'f32[1,128]{1,0:T(1,128)}', space=vmem, size = 0x200, scoped, tag = 'scratch operand']
  %s0 = inlined_call_operand.hbm [shape: f32[2,24,128], index: 0, kind: input, shape index: {}]
  %s1 = inlined_call_operand.hbm [shape: f32[4,128,128], index: 1, kind: input, shape index: {}]
  %s2 = inlined_call_operand.vmem [shape: f32[1,128], index: 2, kind: input, shape index: {}]
  %s3 = inlined_call_operand.hbm [shape: f32[2,1,128], index: 3, kind: output, shape index: {}]
  %s4 = sld [smem:[#allocation0]]
  $region61: #{tpu_custom_call.1} parent=0
    _
  %s6 = ssub.s32 1, %s4
  %s7 = scalar_select 0, %s6, %s4
  $region1: #{tpu_custom_call.1} parent=0
    #allocation4 [shape = 'u8[24576]{0}', space=vmem, size = 0x6000, scoped, tag = 'input window, operand 0']
    #allocation5 [shape = 's32[2]{0}', space=sflag, size = 0x8, scoped, tag = 'scoped memory for tpu_custom_call.1']
    #allocation6 [shape = 's32[2]{0}', space=sflag, size = 0x8, scoped, tag = 'scoped memory for tpu_custom_call.1']
    #allocation7 [shape = 'u8[262144]{0}', space=vmem, size = 0x40000, scoped, tag = 'input window, operand 1, single buffered']
    #allocation8 [shape = 's32[1]{0}', space=sflag, size = 0x4, scoped, tag = 'scoped memory for tpu_custom_call.1']
    #allocation9 [shape = 'u8[1024]{0}', space=vmem, size = 0x400, scoped, tag = 'output window, operand 0']
    %8 = vsyncpa [#allocation5], 0
    %s9 = scalar_lea.sflag [#allocation5], 1
    %10 = vsyncpa %s9, 0
    %11 = vsyncpa [#allocation8], 0
    %12 = vsyncpa [#allocation6], 0
    %s13 = scalar_lea.sflag [#allocation6], 1
    %14 = vsyncpa %s13, 0
    loop: start=0, step=1, limit=4
    $region2: #{tpu_custom_call.1} parent=1 // loop_pre_header
      _
    $region3: #{tpu_custom_call.1} parent=1 // loop_header
      %s16 = sphi 0, %s20
      %p17 = scmp.ge.s32.totalorder %s16, 4
      %s23 = sphi 0, %s35
      %s24 = sphi 0, %s31
      %s25 = sphi 0, %s23
      %s26 = sphi 0, %s24
      %s27 = sphi 0, %s25
      %s28 = sphi 0, %s26
      %s40 = sphi 0, %s42
      %s43 = sphi 0, %s40
      %s44 = sphi 0, %s43
      %s60 = sphi 0, %s44
      %s64 = sphi 0, %s64
      %s66 = sphi 0, %s64
      %s67 = sphi 0, %s66
      %s81 = sphi 0, %s67
      %s85 = sphi 0, %s85
      %s87 = sphi 0, %s85
      %s88 = sphi 0, %s87
      %s102 = sphi 0, %s88
      %s108 = sphi 0, %s110
      %s111 = sphi 0, %s108
      %s112 = sphi 0, %s111
      %s128 = sphi 0, %s112
    $region4: #{tpu_custom_call.1} parent=1 // loop_header_branch
      %19 = sbr.rel (%p17) target = $region8
    $region5: #{tpu_custom_call.1} parent=1 // loop_body
      %s21 = ssub.s32 %s16, 1
      %s22 = ssub.s32 %s16, 2
      %s29 = sadd.s32 1, %s24
      %p30 = scmp.ge.s32.totalorder %s29, 1
      %s31 = scalar_select %p30, 0, %s29
      %s32 = sadd.s32 1, %s23
      %s33 = scalar_select %p30, %s32, %s23
      %p34 = scmp.ge.s32.totalorder %s33, 2
      %s35 = scalar_select %p34, 0, %s33
      %s36 = ssub.s32 %s23, %s35
      %s37 = ssub.s32 %s24, %s31
      %s38 = sor.u32 %s36, %s37
      %p39 = scmp.eq.s32.totalorder %s38, 0
      %s41 = sadd.s32 %s40, 1
      %s42 = scalar_select %p39, %s40, %s41
      %p45 = pneg %p39
      %p46 = scmp.eq.s32.totalorder %s16, 1
      %p47 = por %p45, %p46
      %p48 = scmp.ne.s32.totalorder %s40, %s43
      %p49 = scmp.eq.s32.totalorder %s16, 0
      %p50 = por %p48, %p49
      %p51 = scmp.ne.s32.totalorder %s40, %s43
      %p52 = scmp.eq.s32.totalorder %s21, 1
      %p53 = por %p51, %p52
      %p54 = scmp.ne.s32.totalorder %s43, %s44
      %p55 = scmp.eq.s32.totalorder %s21, 0
      %p56 = por %p54, %p55
      %p57 = scmp.ne.s32.totalorder %s43, %s44
      %p58 = scmp.eq.s32.totalorder %s22, 1
      %p59 = por %p57, %p58
      %p61 = scmp.ne.s32.totalorder %s44, %s60
      %p62 = scmp.eq.s32.totalorder %s22, 0
      %p63 = por %p61, %p62
      %s65 = sadd.s32 %s64, 1
      %p68 = scmp.eq.s32.totalorder %s16, 1
      %p69 = scmp.ne.s32.totalorder %s64, %s66
      %p70 = scmp.eq.s32.totalorder %s16, 0
      %p71 = por %p69, %p70
      %p72 = scmp.ne.s32.totalorder %s64, %s66
      %p73 = scmp.eq.s32.totalorder %s21, 1
      %p74 = por %p72, %p73
      %p75 = scmp.ne.s32.totalorder %s66, %s67
      %p76 = scmp.eq.s32.totalorder %s21, 0
      %p77 = por %p75, %p76
      %p78 = scmp.ne.s32.totalorder %s66, %s67
      %p79 = scmp.eq.s32.totalorder %s22, 1
      %p80 = por %p78, %p79
      %p82 = scmp.ne.s32.totalorder %s67, %s81
      %p83 = scmp.eq.s32.totalorder %s22, 0
      %p84 = por %p82, %p83
      %s86 = sadd.s32 %s85, 1
      %p89 = scmp.eq.s32.totalorder %s16, 1
      %p90 = scmp.ne.s32.totalorder %s85, %s87
      %p91 = scmp.eq.s32.totalorder %s16, 0
      %p92 = por %p90, %p91
      %p93 = scmp.ne.s32.totalorder %s85, %s87
      %p94 = scmp.eq.s32.totalorder %s21, 1
      %p95 = por %p93, %p94
      %p96 = scmp.ne.s32.totalorder %s87, %s88
      %p97 = scmp.eq.s32.totalorder %s21, 0
      %p98 = por %p96, %p97
      %p99 = scmp.ne.s32.totalorder %s87, %s88
      %p100 = scmp.eq.s32.totalorder %s22, 1
      %p101 = por %p99, %p100
      %p103 = scmp.ne.s32.totalorder %s88, %s102
      %p104 = scmp.eq.s32.totalorder %s22, 0
      %p105 = por %p103, %p104
      %s106 = ssub.s32 %s23, %s35
      %p107 = scmp.eq.s32.totalorder %s106, 0
      %s109 = sadd.s32 %s108, 1
      %s110 = scalar_select %p107, %s108, %s109
      %p113 = pneg %p107
      %p114 = scmp.eq.s32.totalorder %s16, 1
      %p115 = por %p113, %p114
      %p116 = scmp.ne.s32.totalorder %s108, %s111
      %p117 = scmp.eq.s32.totalorder %s16, 0
      %p118 = por %p116, %p117
      %p119 = scmp.ne.s32.totalorder %s108, %s111
      %p120 = scmp.eq.s32.totalorder %s21, 1
      %p121 = por %p119, %p120
      %p122 = scmp.ne.s32.totalorder %s111, %s112
      %p123 = scmp.eq.s32.totalorder %s21, 0
      %p124 = por %p122, %p123
      %p125 = scmp.ne.s32.totalorder %s111, %s112
      %p126 = scmp.eq.s32.totalorder %s22, 1
      %p127 = por %p125, %p126
      %p129 = scmp.ne.s32.totalorder %s112, %s128
      %p130 = scmp.eq.s32.totalorder %s22, 0
      %p131 = por %p129, %p130
      %p132 = scmp.le.s32.totalorder 1, %s16
      %p133 = scmp.lt.s32.totalorder %s16, 3
      %p134 = pnand %p132, %p133
      %p135 = pneg %p134
      // Predicated region
      $region9: #{tpu_custom_call.1} parent=5 // pred_check
        _
      $region10: #{tpu_custom_call.1} parent=5 // pred_check_branch
        %137 = sbr.rel (%p134) target = $region12
      $region11: #{tpu_custom_call.1} parent=5 // pred_region
        %s138 = ssub.s32 %s16, 1
        // Predicated region
        $region13: #{tpu_custom_call.1} parent=11 // pred_check
          %p139 = pneg %p77
        $region14: #{tpu_custom_call.1} parent=11 // pred_check_branch
          %141 = sbr.rel (%p139) target = $region16
        $region15: #{tpu_custom_call.1} parent=11 // pred_region
          %s143 = ssub.s32 8192, 8192
          %144 = vsyncadd [#allocation8], %s143
          %s145 = sshll.u32 [#allocation7], 4
          %s146 = int_to_ptr.vmem [resolvable:$true] %s145
          %151 = dma.hbm_to_vmem [thread:$0]  %s1, 8192, %s146, [#allocation8], 128, 128, 8
        $region16: #{tpu_custom_call.1} parent=11 // pred_fallthru
          _
        // Predicated region
        $region17: #{tpu_custom_call.1} parent=11 // pred_check
          %p152 = pneg %p98
        $region18: #{tpu_custom_call.1} parent=11 // pred_check_branch
          %154 = sbr.rel (%p152) target = $region20
        $region19: #{tpu_custom_call.1} parent=11 // pred_region
          _
        $region20: #{tpu_custom_call.1} parent=11 // pred_fallthru
          _
      $region12: #{tpu_custom_call.1} parent=5 // pred_fallthru
        _
      %p155 = scmp.lt.s32.totalorder %s16, 2
      // Predicated region
      $region21: #{tpu_custom_call.1} parent=5 // pred_check
        %p156 = pneg %p155
      $region22: #{tpu_custom_call.1} parent=5 // pred_check_branch
        %158 = sbr.rel (%p156) target = $region24
      $region23: #{tpu_custom_call.1} parent=5 // pred_region
        // Predicated region
        $region25: #{tpu_custom_call.1} parent=23 // pred_check
          %p159 = pneg %p50
        $region26: #{tpu_custom_call.1} parent=23 // pred_check_branch
          %161 = sbr.rel (%p159) target = $region28
        $region27: #{tpu_custom_call.1} parent=23 // pred_region
          %s162 = sand.u32 %s40, 1
          %s163 = scalar_lea.sflag [#allocation5], %s162
          %s164 = sand.u32 %s40, 1
          %s165 = smul.addr %s164, 24
          %s166 = scalar_lea.vmem [#allocation4], %s165
          %s167 = smul.u32 3, %s24
          %s169 = ssub.s32 384, 384
          %170 = vsyncadd %s163, %s169
          %s171 = smul.addr %s23, 3
          %s172 = sadd.s32 %s167, %s171
          %s173 = smul.addr %s172, 128
          %s174 = scalar_lea.hbm %s0, %s173
          %s175 = sshll.u32 %s166, 4
          %s176 = int_to_ptr.vmem [resolvable:$true] %s175
          %181 = dma.hbm_to_vmem [thread:$0]  %s174, 384, %s176, %s163, 128, 128, 8
        $region28: #{tpu_custom_call.1} parent=23 // pred_fallthru
          _
      $region24: #{tpu_custom_call.1} parent=5 // pred_fallthru
        _
      %p182 = scmp.le.s32.totalorder 1, %s16
      %p183 = scmp.lt.s32.totalorder %s16, 3
      %p184 = pnand %p182, %p183
      %p185 = pneg %p184
      // Predicated region
      $region29: #{tpu_custom_call.1} parent=5 // pred_check
        _
      $region30: #{tpu_custom_call.1} parent=5 // pred_check_branch
        %187 = sbr.rel (%p184) target = $region32
      $region31: #{tpu_custom_call.1} parent=5 // pred_region
        %s188 = ssub.s32 %s16, 1
        %s189 = sand.u32 %s43, 1
        %s190 = scalar_lea.sflag [#allocation5], %s189
        %s191 = sand.u32 %s43, 1
        %s192 = smul.addr %s191, 24
        %s193 = scalar_lea.vmem [#allocation4], %s192
        // Predicated region
        $region33: #{tpu_custom_call.1} parent=31 // pred_check
          %p194 = pneg %p56
        $region34: #{tpu_custom_call.1} parent=31 // pred_check_branch
          %196 = sbr.rel (%p194) target = $region36
        $region35: #{tpu_custom_call.1} parent=31 // pred_region
          %197 = dma.done %s190, 384
        $region36: #{tpu_custom_call.1} parent=31 // pred_fallthru
          _
        // Predicated region
        $region37: #{tpu_custom_call.1} parent=31 // pred_check
          %p198 = pneg %p77
        $region38: #{tpu_custom_call.1} parent=31 // pred_check_branch
          %200 = sbr.rel (%p198) target = $region40
        $region39: #{tpu_custom_call.1} parent=31 // pred_region
          %201 = dma.done [#allocation8], 8192
        $region40: #{tpu_custom_call.1} parent=31 // pred_fallthru
          _
        %s202 = sand.u32 %s43, 1
        %s203 = scalar_lea.sflag [#allocation5], %s202
        %s204 = sand.u32 %s43, 1
        %s205 = smul.addr %s204, 24
        %s206 = scalar_lea.vmem [#allocation4], %s205
        %p207 = pneg %p56
        %p208 = pneg %p53
        %p209 = pneg %p77
        %p210 = pneg %p74
        %p211 = pneg %p98
        %p212 = pneg %p95
        %p213 = pneg %p124
        %p214 = pneg %p121
        %s215 = sand.u32 %s111, 1
        %s216 = scalar_lea.sflag [#allocation6], %s215
        %s217 = sand.u32 %s111, 1
        %s218 = scalar_lea.vmem [#allocation9], %s217
        %s219 = smul.u32 3, %s26
        %p220 = scmp.eq.s32.totalorder %s26, 0
        // Predicated region
        $region41: #{tpu_custom_call.1} parent=31 // pred_check
          %p221 = pneg %p220
        $region42: #{tpu_custom_call.1} parent=31 // pred_check_branch
          %223 = sbr.rel (%p221) target = $region44
        $region43: #{tpu_custom_call.1} parent=31 // pred_region
          %224 = vst [vmem:[#allocation3] sm:$0x1] -inf
          %225 = vst [vmem:[#allocation2] sm:$0xff] 0.0
        $region44: #{tpu_custom_call.1} parent=31 // pred_fallthru
          _
        %v226 = vld [vmem:[%s193] sm:$0xff]
        %v227 = vld [vmem:[%s193 + $0x8] sm:$0xff]
        %v228 = vld [vmem:[%s193 + $0x10] sm:$0xff]
        %229 = vst [vmem:[#allocation2 + $0x8] sm:$0xff] %v226
        %230 = vst [vmem:[#allocation2 + $0x10] sm:$0xff] %v227
        %231 = vst [vmem:[#allocation2 + $0x18] sm:$0xff] %v228
        %v232 = vld [vmem:[#allocation2 + $0x5] sm:$0xff]
        %v233 = vld [vmem:[#allocation2 + $0xd] sm:$0xff]
        %v234 = vld [vmem:[#allocation2 + $0x15] sm:$0xff]
        %v235 = vld [vmem:[#allocation7] sm:$0xff]
        %v236 = vld [vmem:[#allocation7 + $0x8] sm:$0xff]
        %v237 = vld [vmem:[#allocation7 + $0x10] sm:$0xff]
        %v238 = vld [vmem:[#allocation7 + $0x18] sm:$0xff]
        %v239 = vld [vmem:[#allocation7 + $0x20] sm:$0xff]
        %v240 = vld [vmem:[#allocation7 + $0x28] sm:$0xff]
        %v241 = vld [vmem:[#allocation7 + $0x30] sm:$0xff]
        %v242 = vld [vmem:[#allocation7 + $0x38] sm:$0xff]
        %v243 = vld [vmem:[#allocation7 + $0x40] sm:$0xff]
        %v244 = vld [vmem:[#allocation7 + $0x48] sm:$0xff]
        %v245 = vld [vmem:[#allocation7 + $0x50] sm:$0xff]
        %v246 = vld [vmem:[#allocation7 + $0x58] sm:$0xff]
        %v247 = vld [vmem:[#allocation7 + $0x60] sm:$0xff]
        %v248 = vld [vmem:[#allocation7 + $0x68] sm:$0xff]
        %v249 = vld [vmem:[#allocation7 + $0x70] sm:$0xff]
        %v250 = vld [vmem:[#allocation7 + $0x78] sm:$0xff]
        %v251 = vld [vmem:[#allocation2 + $0x6] sm:$0xff]
        %v252 = vld [vmem:[#allocation2 + $0xe] sm:$0xff]
        %v253 = vld [vmem:[#allocation2 + $0x16] sm:$0xff]
        %s254 = scalar_lea.vmem [#allocation7], 128
        %v255 = vld [vmem:[%s254] sm:$0xff]
        %v256 = vld [vmem:[%s254 + $0x8] sm:$0xff]
        %v257 = vld [vmem:[%s254 + $0x10] sm:$0xff]
        %v258 = vld [vmem:[%s254 + $0x18] sm:$0xff]
        %v259 = vld [vmem:[%s254 + $0x20] sm:$0xff]
        %v260 = vld [vmem:[%s254 + $0x28] sm:$0xff]
        %v261 = vld [vmem:[%s254 + $0x30] sm:$0xff]
        %v262 = vld [vmem:[%s254 + $0x38] sm:$0xff]
        %v263 = vld [vmem:[%s254 + $0x40] sm:$0xff]
        %v264 = vld [vmem:[%s254 + $0x48] sm:$0xff]
        %v265 = vld [vmem:[%s254 + $0x50] sm:$0xff]
        %v266 = vld [vmem:[%s254 + $0x58] sm:$0xff]
        %v267 = vld [vmem:[%s254 + $0x60] sm:$0xff]
        %v268 = vld [vmem:[%s254 + $0x68] sm:$0xff]
        %v269 = vld [vmem:[%s254 + $0x70] sm:$0xff]
        %v270 = vld [vmem:[%s254 + $0x78] sm:$0xff]
        %271 = vmatprep.subr.mxu0 0.0
        %272 = vmatpush1.msra.mxu0 %v255
        %273 = vmatprep.subr.mxu0 0.0
        %274 = vmatpush1.msra.mxu0 %v256
        %275 = vmatprep.subr.mxu0 0.0
        %276 = vmatpush1.msra.mxu0 %v257
        %277 = vmatprep.subr.mxu0 0.0
        %278 = vmatpush1.msra.mxu0 %v258
        %279 = vmatprep.subr.mxu0 0.0
        %280 = vmatpush1.msra.mxu0 %v259
        %281 = vmatprep.subr.mxu0 0.0
        %282 = vmatpush1.msra.mxu0 %v260
        %283 = vmatprep.subr.mxu0 0.0
        %284 = vmatpush1.msra.mxu0 %v261
        %285 = vmatprep.subr.mxu0 0.0
        %286 = vmatpush1.msra.mxu0 %v262
        %287 = vmatprep.subr.mxu0 0.0
        %288 = vmatpush1.msra.mxu0 %v263
        %289 = vmatprep.subr.mxu0 0.0
        %290 = vmatpush1.msra.mxu0 %v264
        %291 = vmatprep.subr.mxu0 0.0
        %292 = vmatpush1.msra.mxu0 %v265
        %293 = vmatprep.subr.mxu0 0.0
        %294 = vmatpush1.msra.mxu0 %v266
        %295 = vmatprep.subr.mxu0 0.0
        %296 = vmatpush1.msra.mxu0 %v267
        %297 = vmatprep.subr.mxu0 0.0
        %298 = vmatpush1.msra.mxu0 %v268
        %299 = vmatprep.subr.mxu0 0.0
        %300 = vmatpush1.msra.mxu0 %v269
        %301 = vmatprep.subr.mxu0 0.0
        %302 = vmatpush1.msra.mxu0 %v270
        %303 = vmatprep.subr.mxu0 0.0
        %304 = vmatpush1.msra.mxu0 0.0
        %305 = vmatprep.subr.mxu0 0.0
        %306 = vmatpush1.msra.mxu0 0.0
        %307 = vmatprep.subr.mxu0 0.0
        %308 = vmatpush1.msra.mxu0 0.0
        %309 = vmatprep.subr.mxu0 0.0
        %310 = vmatpush1.msra.mxu0 0.0
        %311 = vmatprep.subr.mxu0 0.0
        %312 = vmatpush1.msra.mxu0 0.0
        %313 = vmatprep.subr.mxu0 0.0
        %314 = vmatpush1.msra.mxu0 0.0
        %315 = vmatprep.subr.mxu0 0.0
        %316 = vmatpush1.msra.mxu0 0.0
        %317 = vmatprep.subr.mxu0 0.0
        %318 = vmatpush1.msra.mxu0 0.0
        %319 = vmatprep.subr.mxu0 0.0
        %320 = vmatpush1.msra.mxu0 0.0
        %321 = vmatprep.subr.mxu0 0.0
        %322 = vmatpush1.msra.mxu0 0.0
        %323 = vmatprep.subr.mxu0 0.0
        %324 = vmatpush1.msra.mxu0 0.0
        %325 = vmatprep.subr.mxu0 0.0
        %326 = vmatpush1.msra.mxu0 0.0
        %327 = vmatprep.subr.mxu0 0.0
        %328 = vmatpush1.msra.mxu0 0.0
        %329 = vmatprep.subr.mxu0 0.0
        %330 = vmatpush1.msra.mxu0 0.0
        %331 = vmatprep.subr.mxu0 0.0
        %332 = vmatpush1.msra.mxu0 0.0
        %333 = vmatprep.subr.mxu0 0.0
        %334 = vmatpush1.msra.mxu0 0.0
        %335 = vmatprep.mubr.f32.mxu0 0.0
        %336 = vmatmul.mubr.f32.gmra.mrb[0].mxu0 %v251
        %v337 = vpop.f32.mrb[0].mxu0
        %v338 = vadd.f32 0.0, %v337
        %v339 = vpop.f32.mrb[0].mxu0
        %340 = vmatprep.mubr.f32.mxu0 0.0
        %341 = vmatmul.mubr.f32.gmra.mrb[0].mxu0 %v252
        %v342 = vpop.f32.mrb[0].mxu0
        %v343 = vadd.f32 0.0, %v342
        %v344 = vpop.f32.mrb[0].mxu0
        %345 = vmatprep.mubr.f32.mxu0 0.0
        %346 = vmatmul.mubr.f32.gmra.mrb[0].mxu0 %v253
        %v347 = vpop.f32.mrb[0].mxu0
        %v348 = vadd.f32 0.0, %v347
        %v349 = vpop.f32.mrb[0].mxu0
        %350 = vdwg.mxu0
        %351 = vmatprep.subr.mxu0 0.0
        %352 = vmatpush1.msra.mxu0 %v235
        %353 = vmatprep.subr.mxu0 0.0
        %354 = vmatpush1.msra.mxu0 %v236
        %355 = vmatprep.subr.mxu0 0.0
        %356 = vmatpush1.msra.mxu0 %v237
        %357 = vmatprep.subr.mxu0 0.0
        %358 = vmatpush1.msra.mxu0 %v238
        %359 = vmatprep.subr.mxu0 0.0
        %360 = vmatpush1.msra.mxu0 %v239
        %361 = vmatprep.subr.mxu0 0.0
        %362 = vmatpush1.msra.mxu0 %v240
        %363 = vmatprep.subr.mxu0 0.0
        %364 = vmatpush1.msra.mxu0 %v241
        %365 = vmatprep.subr.mxu0 0.0
        %366 = vmatpush1.msra.mxu0 %v242
        %367 = vmatprep.subr.mxu0 0.0
        %368 = vmatpush1.msra.mxu0 %v243
        %369 = vmatprep.subr.mxu0 0.0
        %370 = vmatpush1.msra.mxu0 %v244
        %371 = vmatprep.subr.mxu0 0.0
        %372 = vmatpush1.msra.mxu0 %v245
        %373 = vmatprep.subr.mxu0 0.0
        %374 = vmatpush1.msra.mxu0 %v246
        %375 = vmatprep.subr.mxu0 0.0
        %376 = vmatpush1.msra.mxu0 %v247
        %377 = vmatprep.subr.mxu0 0.0
        %378 = vmatpush1.msra.mxu0 %v248
        %379 = vmatprep.subr.mxu0 0.0
        %380 = vmatpush1.msra.mxu0 %v249
        %381 = vmatprep.subr.mxu0 0.0
        %382 = vmatpush1.msra.mxu0 %v250
        %383 = vmatprep.subr.mxu0 0.0
        %384 = vmatpush1.msra.mxu0 0.0
        %385 = vmatprep.subr.mxu0 0.0
        %386 = vmatpush1.msra.mxu0 0.0
        %387 = vmatprep.subr.mxu0 0.0
        %388 = vmatpush1.msra.mxu0 0.0
        %389 = vmatprep.subr.mxu0 0.0
        %390 = vmatpush1.msra.mxu0 0.0
        %391 = vmatprep.subr.mxu0 0.0
        %392 = vmatpush1.msra.mxu0 0.0
        %393 = vmatprep.subr.mxu0 0.0
        %394 = vmatpush1.msra.mxu0 0.0
        %395 = vmatprep.subr.mxu0 0.0
        %396 = vmatpush1.msra.mxu0 0.0
        %397 = vmatprep.subr.mxu0 0.0
        %398 = vmatpush1.msra.mxu0 0.0
        %399 = vmatprep.subr.mxu0 0.0
        %400 = vmatpush1.msra.mxu0 0.0
        %401 = vmatprep.subr.mxu0 0.0
        %402 = vmatpush1.msra.mxu0 0.0
        %403 = vmatprep.subr.mxu0 0.0
        %404 = vmatpush1.msra.mxu0 0.0
        %405 = vmatprep.subr.mxu0 0.0
        %406 = vmatpush1.msra.mxu0 0.0
        %407 = vmatprep.subr.mxu0 0.0
        %408 = vmatpush1.msra.mxu0 0.0
        %409 = vmatprep.subr.mxu0 0.0
        %410 = vmatpush1.msra.mxu0 0.0
        %411 = vmatprep.subr.mxu0 0.0
        %412 = vmatpush1.msra.mxu0 0.0
        %413 = vmatprep.subr.mxu0 0.0
        %414 = vmatpush1.msra.mxu0 0.0
        %415 = vmatprep.mubr.f32.mxu0 0.0
        %416 = vmatmul.mubr.f32.gmra.mrb[0].mxu0 %v232
        %v417 = vpop.f32.mrb[0].mxu0
        %v418 = vadd.f32 %v338, %v417
        %v419 = vpop.f32.mrb[0].mxu0
        %420 = vmatprep.mubr.f32.mxu0 0.0
        %421 = vmatmul.mubr.f32.gmra.mrb[0].mxu0 %v233
        %v422 = vpop.f32.mrb[0].mxu0
        %v423 = vadd.f32 %v343, %v422
        %v424 = vpop.f32.mrb[0].mxu0
        %425 = vmatprep.mubr.f32.mxu0 0.0
        %426 = vmatmul.mubr.f32.gmra.mrb[0].mxu0 %v234
        %v427 = vpop.f32.mrb[0].mxu0
        %v428 = vadd.f32 %v348, %v427
        %v429 = vpop.f32.mrb[0].mxu0
        %430 = vdwg.mxu0
        %v431 = vld [vmem:[#allocation2 + $0x7] sm:$0xff]
        %v432 = vld [vmem:[#allocation2 + $0xf] sm:$0xff]
        %v433 = vld [vmem:[#allocation2 + $0x17] sm:$0xff]
        %s434 = scalar_lea.vmem [#allocation7], 256
        %v435 = vld [vmem:[%s434] sm:$0xff]
        %v436 = vld [vmem:[%s434 + $0x8] sm:$0xff]
        %v437 = vld [vmem:[%s434 + $0x10] sm:$0xff]
        %v438 = vld [vmem:[%s434 + $0x18] sm:$0xff]
        %v439 = vld [vmem:[%s434 + $0x20] sm:$0xff]
        %v440 = vld [vmem:[%s434 + $0x28] sm:$0xff]
        %v441 = vld [vmem:[%s434 + $0x30] sm:$0xff]
        %v442 = vld [vmem:[%s434 + $0x38] sm:$0xff]
        %v443 = vld [vmem:[%s434 + $0x40] sm:$0xff]
        %v444 = vld [vmem:[%s434 + $0x48] sm:$0xff]
        %v445 = vld [vmem:[%s434 + $0x50] sm:$0xff]
        %v446 = vld [vmem:[%s434 + $0x58] sm:$0xff]
        %v447 = vld [vmem:[%s434 + $0x60] sm:$0xff]
        %v448 = vld [vmem:[%s434 + $0x68] sm:$0xff]
        %v449 = vld [vmem:[%s434 + $0x70] sm:$0xff]
        %v450 = vld [vmem:[%s434 + $0x78] sm:$0xff]
        %451 = vmatprep.subr.mxu0 0.0
        %452 = vmatpush1.msra.mxu0 %v435
        %453 = vmatprep.subr.mxu0 0.0
        %454 = vmatpush1.msra.mxu0 %v436
        %455 = vmatprep.subr.mxu0 0.0
        %456 = vmatpush1.msra.mxu0 %v437
        %457 = vmatprep.subr.mxu0 0.0
        %458 = vmatpush1.msra.mxu0 %v438
        %459 = vmatprep.subr.mxu0 0.0
        %460 = vmatpush1.msra.mxu0 %v439
        %461 = vmatprep.subr.mxu0 0.0
        %462 = vmatpush1.msra.mxu0 %v440
        %463 = vmatprep.subr.mxu0 0.0
        %464 = vmatpush1.msra.mxu0 %v441
        %465 = vmatprep.subr.mxu0 0.0
        %466 = vmatpush1.msra.mxu0 %v442
        %467 = vmatprep.subr.mxu0 0.0
        %468 = vmatpush1.msra.mxu0 %v443
        %469 = vmatprep.subr.mxu0 0.0
        %470 = vmatpush1.msra.mxu0 %v444
        %471 = vmatprep.subr.mxu0 0.0
        %472 = vmatpush1.msra.mxu0 %v445
        %473 = vmatprep.subr.mxu0 0.0
        %474 = vmatpush1.msra.mxu0 %v446
        %475 = vmatprep.subr.mxu0 0.0
        %476 = vmatpush1.msra.mxu0 %v447
        %477 = vmatprep.subr.mxu0 0.0
        %478 = vmatpush1.msra.mxu0 %v448
        %479 = vmatprep.subr.mxu0 0.0
        %480 = vmatpush1.msra.mxu0 %v449
        %481 = vmatprep.subr.mxu0 0.0
        %482 = vmatpush1.msra.mxu0 %v450
        %483 = vmatprep.subr.mxu0 0.0
        %484 = vmatpush1.msra.mxu0 0.0
        %485 = vmatprep.subr.mxu0 0.0
        %486 = vmatpush1.msra.mxu0 0.0
        %487 = vmatprep.subr.mxu0 0.0
        %488 = vmatpush1.msra.mxu0 0.0
        %489 = vmatprep.subr.mxu0 0.0
        %490 = vmatpush1.msra.mxu0 0.0
        %491 = vmatprep.subr.mxu0 0.0
        %492 = vmatpush1.msra.mxu0 0.0
        %493 = vmatprep.subr.mxu0 0.0
        %494 = vmatpush1.msra.mxu0 0.0
        %495 = vmatprep.subr.mxu0 0.0
        %496 = vmatpush1.msra.mxu0 0.0
        %497 = vmatprep.subr.mxu0 0.0
        %498 = vmatpush1.msra.mxu0 0.0
        %499 = vmatprep.subr.mxu0 0.0
        %500 = vmatpush1.msra.mxu0 0.0
        %501 = vmatprep.subr.mxu0 0.0
        %502 = vmatpush1.msra.mxu0 0.0
        %503 = vmatprep.subr.mxu0 0.0
        %504 = vmatpush1.msra.mxu0 0.0
        %505 = vmatprep.subr.mxu0 0.0
        %506 = vmatpush1.msra.mxu0 0.0
        %507 = vmatprep.subr.mxu0 0.0
        %508 = vmatpush1.msra.mxu0 0.0
        %509 = vmatprep.subr.mxu0 0.0
        %510 = vmatpush1.msra.mxu0 0.0
        %511 = vmatprep.subr.mxu0 0.0
        %512 = vmatpush1.msra.mxu0 0.0
        %513 = vmatprep.subr.mxu0 0.0
        %514 = vmatpush1.msra.mxu0 0.0
        %515 = vmatprep.mubr.f32.mxu0 0.0
        %516 = vmatmul.mubr.f32.gmra.mrb[0].mxu0 %v431
        %v517 = vpop.f32.mrb[0].mxu0
        %v518 = vadd.f32 0.0, %v517
        %v519 = vpop.f32.mrb[0].mxu0
        %520 = vmatprep.mubr.f32.mxu0 0.0
        %521 = vmatmul.mubr.f32.gmra.mrb[0].mxu0 %v432
        %v522 = vpop.f32.mrb[0].mxu0
        %v523 = vadd.f32 0.0, %v522
        %v524 = vpop.f32.mrb[0].mxu0
        %525 = vmatprep.mubr.f32.mxu0 0.0
        %526 = vmatmul.mubr.f32.gmra.mrb[0].mxu0 %v433
        %v527 = vpop.f32.mrb[0].mxu0
        %v528 = vadd.f32 0.0, %v527
        %v529 = vpop.f32.mrb[0].mxu0
        %530 = vdwg.mxu0
        %v531 = vadd.f32 %v418, %v518
        %v532 = vadd.f32 %v423, %v523
        %v533 = vadd.f32 %v428, %v528
        %v534 = vld [vmem:[#allocation2 + $0x8] sm:$0xff]
        %v535 = vld [vmem:[#allocation2 + $0x10] sm:$0xff]
        %v536 = vld [vmem:[#allocation2 + $0x18] sm:$0xff]
        %s537 = scalar_lea.vmem [#allocation7], 384
        %v538 = vld [vmem:[%s537] sm:$0xff]
        %v539 = vld [vmem:[%s537 + $0x8] sm:$0xff]
        %v540 = vld [vmem:[%s537 + $0x10] sm:$0xff]
        %v541 = vld [vmem:[%s537 + $0x18] sm:$0xff]
        %v542 = vld [vmem:[%s537 + $0x20] sm:$0xff]
        %v543 = vld [vmem:[%s537 + $0x28] sm:$0xff]
        %v544 = vld [vmem:[%s537 + $0x30] sm:$0xff]
        %v545 = vld [vmem:[%s537 + $0x38] sm:$0xff]
        %v546 = vld [vmem:[%s537 + $0x40] sm:$0xff]
        %v547 = vld [vmem:[%s537 + $0x48] sm:$0xff]
        %v548 = vld [vmem:[%s537 + $0x50] sm:$0xff]
        %v549 = vld [vmem:[%s537 + $0x58] sm:$0xff]
        %v550 = vld [vmem:[%s537 + $0x60] sm:$0xff]
        %v551 = vld [vmem:[%s537 + $0x68] sm:$0xff]
        %v552 = vld [vmem:[%s537 + $0x70] sm:$0xff]
        %v553 = vld [vmem:[%s537 + $0x78] sm:$0xff]
        %554 = vmatprep.subr.mxu0 0.0
        %555 = vmatpush1.msra.mxu0 %v538
        %556 = vmatprep.subr.mxu0 0.0
        %557 = vmatpush1.msra.mxu0 %v539
        %558 = vmatprep.subr.mxu0 0.0
        %559 = vmatpush1.msra.mxu0 %v540
        %560 = vmatprep.subr.mxu0 0.0
        %561 = vmatpush1.msra.mxu0 %v541
        %562 = vmatprep.subr.mxu0 0.0
        %563 = vmatpush1.msra.mxu0 %v542
        %564 = vmatprep.subr.mxu0 0.0
        %565 = vmatpush1.msra.mxu0 %v543
        %566 = vmatprep.subr.mxu0 0.0
        %567 = vmatpush1.msra.mxu0 %v544
        %568 = vmatprep.subr.mxu0 0.0
        %569 = vmatpush1.msra.mxu0 %v545
        %570 = vmatprep.subr.mxu0 0.0
        %571 = vmatpush1.msra.mxu0 %v546
        %572 = vmatprep.subr.mxu0 0.0
        %573 = vmatpush1.msra.mxu0 %v547
        %574 = vmatprep.subr.mxu0 0.0
        %575 = vmatpush1.msra.mxu0 %v548
        %576 = vmatprep.subr.mxu0 0.0
        %577 = vmatpush1.msra.mxu0 %v549
        %578 = vmatprep.subr.mxu0 0.0
        %579 = vmatpush1.msra.mxu0 %v550
        %580 = vmatprep.subr.mxu0 0.0
        %581 = vmatpush1.msra.mxu0 %v551
        %582 = vmatprep.subr.mxu0 0.0
        %583 = vmatpush1.msra.mxu0 %v552
        %584 = vmatprep.subr.mxu0 0.0
        %585 = vmatpush1.msra.mxu0 %v553
        %586 = vmatprep.subr.mxu0 0.0
        %587 = vmatpush1.msra.mxu0 0.0
        %588 = vmatprep.subr.mxu0 0.0
        %589 = vmatpush1.msra.mxu0 0.0
        %590 = vmatprep.subr.mxu0 0.0
        %591 = vmatpush1.msra.mxu0 0.0
        %592 = vmatprep.subr.mxu0 0.0
        %593 = vmatpush1.msra.mxu0 0.0
        %594 = vmatprep.subr.mxu0 0.0
        %595 = vmatpush1.msra.mxu0 0.0
        %596 = vmatprep.subr.mxu0 0.0
        %597 = vmatpush1.msra.mxu0 0.0
        %598 = vmatprep.subr.mxu0 0.0
        %599 = vmatpush1.msra.mxu0 0.0
        %600 = vmatprep.subr.mxu0 0.0
        %601 = vmatpush1.msra.mxu0 0.0
        %602 = vmatprep.subr.mxu0 0.0
        %603 = vmatpush1.msra.mxu0 0.0
        %604 = vmatprep.subr.mxu0 0.0
        %605 = vmatpush1.msra.mxu0 0.0
        %606 = vmatprep.subr.mxu0 0.0
        %607 = vmatpush1.msra.mxu0 0.0
        %608 = vmatprep.subr.mxu0 0.0
        %609 = vmatpush1.msra.mxu0 0.0
        %610 = vmatprep.subr.mxu0 0.0
        %611 = vmatpush1.msra.mxu0 0.0
        %612 = vmatprep.subr.mxu0 0.0
        %613 = vmatpush1.msra.mxu0 0.0
        %614 = vmatprep.subr.mxu0 0.0
        %615 = vmatpush1.msra.mxu0 0.0
        %616 = vmatprep.subr.mxu0 0.0
        %617 = vmatpush1.msra.mxu0 0.0
        %618 = vmatprep.mubr.f32.mxu0 0.0
        %619 = vmatmul.mubr.f32.gmra.mrb[0].mxu0 %v534
        %v620 = vpop.f32.mrb[0].mxu0
        %v621 = vadd.f32 0.0, %v620
        %v622 = vpop.f32.mrb[0].mxu0
        %623 = vmatprep.mubr.f32.mxu0 0.0
        %624 = vmatmul.mubr.f32.gmra.mrb[0].mxu0 %v535
        %v625 = vpop.f32.mrb[0].mxu0
        %v626 = vadd.f32 0.0, %v625
        %v627 = vpop.f32.mrb[0].mxu0
        %628 = vmatprep.mubr.f32.mxu0 0.0
        %629 = vmatmul.mubr.f32.gmra.mrb[0].mxu0 %v536
        %v630 = vpop.f32.mrb[0].mxu0
        %v631 = vadd.f32 0.0, %v630
        %v632 = vpop.f32.mrb[0].mxu0
        %633 = vdwg.mxu0
        %v634 = vadd.f32 %v531, %v621
        %v635 = vadd.f32 %v532, %v626
        %v636 = vadd.f32 %v533, %v631
        %v637 = vlaneseq
        %v638 = vand.u32 %v637, 127
        %vm639 = vcmp.ge.s32.totalorder %v638, 0
        %vm640 = vcmp.lt.s32.totalorder %v638, 8
        %vm641 = vmand %vm639, %vm640
        %v642 = vsel %vm641, 15, 16
        %vm643 = vcmp.ge.s32.totalorder %v638, 8
        %vm644 = vcmp.lt.s32.totalorder %v638, 16
        %vm645 = vmand %vm643, %vm644
        %v646 = vsel %vm645, 14, %v642
        %vm647 = vcmp.ge.s32.totalorder %v638, 16
        %vm648 = vcmp.lt.s32.totalorder %v638, 24
        %vm649 = vmand %vm647, %vm648
        %v650 = vsel %vm649, 13, %v646
        %v651 = vlaneseq
        %v652 = vshrl.u32 %v651, 7
        %v653 = vadd.s32 %v652, 8
        %v654 = vadd.s32 %v652, 16
        %s655 = smul.u32 %s26, 24
        %s656 = ssub.s32 %s655, 3
        %v657 = vstv %s656
        %v658 = vadd.s32 %v652, %v657
        %v659 = vadd.s32 %v653, %v657
        %v660 = vadd.s32 %v654, %v657
        %vm661 = vcmp.ge.s32.totalorder %v658, 0
        %vm662 = vcmp.ge.s32.totalorder %v659, 0
        %vm663 = vcmp.ge.s32.totalorder %v660, 0
        %vm664 = vcmp.lt.s32.totalorder %v658, %v650
        %vm665 = vcmp.lt.s32.totalorder %v659, %v650
        %vm666 = vcmp.lt.s32.totalorder %v660, %v650
        %vm667 = vmand %vm661, %vm664
        %vm668 = vmand %vm662, %vm665
        %vm669 = vmand %vm663, %vm666
        %v670 = vsel %vm667, %v634, -inf
        %v671 = vsel %vm668, %v635, -inf
        %v672 = vsel %vm669, %v636, -inf
        %v673 = vld [vmem:[#allocation3] sm:$0x1]
        %v674 = vmax.f32 %v670, %v671
        %v675 = vmax.f32 %v674, %v672
        %v676 = vrot.slane %v675, 4
        %v677 = vmax.f32 %v675, %v676
        %v678 = vrot.slane %v677, 2
        %v679 = vmax.f32 %v677, %v678
        %v680 = vrot.slane %v679, 1
        %v681 = vmax.f32 %v679, %v680
        %v682 = vmax.f32 %v673, %v681
        %683 = vst [vmem:[#allocation3] sm:$0x1] %v682
        %v684 = vld [vmem:[#allocation2 + $0x1d] sm:$0x7]
        %685 = vst [vmem:[#allocation2 + $0x5] sm:$0x7] %v684
        // Predicated region
        $region45: #{tpu_custom_call.1} parent=31 // pred_check
          %p686 = pneg %p220
        $region46: #{tpu_custom_call.1} parent=31 // pred_check_branch
          %688 = sbr.rel (%p686) target = $region48
        $region47: #{tpu_custom_call.1} parent=31 // pred_region
          %v689 = vld [vmem:[#allocation3] sm:$0x1]
          %v690 = vld [vmem:[%s2] sm:$0x1]
          %v691 = vadd.f32 %v689, %v690
          %v692 = vmax.f32 %v691, 0.0
          %693 = vst [vmem:[%s218] sm:$0x1] %v692
        $region48: #{tpu_custom_call.1} parent=31 // pred_fallthru
          _
        %s694 = sand.u32 %s111, 1
        %s695 = scalar_lea.sflag [#allocation6], %s694
        %s696 = sand.u32 %s111, 1
        %s697 = scalar_lea.vmem [#allocation9], %s696
        // Predicated region
        $region49: #{tpu_custom_call.1} parent=31 // pred_check
          %p698 = pneg %p121
        $region50: #{tpu_custom_call.1} parent=31 // pred_check_branch
          %700 = sbr.rel (%p698) target = $region52
        $region51: #{tpu_custom_call.1} parent=31 // pred_region
          %s702 = ssub.s32 16, 16
          %703 = vsyncadd %s695, %s702
          %s704 = smul.addr %s25, 16
          %s705 = scalar_lea.hbm %s3, %s704
          %s707 = sshll.u32 %s697, 4
          %s708 = int_to_ptr.vmem [resolvable:$true] %s707
          %710 = dma.vmem_to_hbm [thread:$0]  %s708, 16, %s705, %s695
        $region52: #{tpu_custom_call.1} parent=31 // pred_fallthru
          _
      $region32: #{tpu_custom_call.1} parent=5 // pred_fallthru
        _
      %p711 = scmp.le.s32.totalorder 2, %s16
      // Predicated region
      $region53: #{tpu_custom_call.1} parent=5 // pred_check
        %p712 = pneg %p711
      $region54: #{tpu_custom_call.1} parent=5 // pred_check_branch
        %714 = sbr.rel (%p712) target = $region56
      $region55: #{tpu_custom_call.1} parent=5 // pred_region
        %s715 = ssub.s32 %s16, 2
        // Predicated region
        $region57: #{tpu_custom_call.1} parent=55 // pred_check
          %p716 = pneg %p127
        $region58: #{tpu_custom_call.1} parent=55 // pred_check_branch
          %718 = sbr.rel (%p716) target = $region60
        $region59: #{tpu_custom_call.1} parent=55 // pred_region
          %s719 = sand.u32 %s112, 1
          %s720 = scalar_lea.sflag [#allocation6], %s719
          %s721 = sand.u32 %s112, 1
          %s722 = scalar_lea.vmem [#allocation9], %s721
          %723 = dma.done %s720, 16
        $region60: #{tpu_custom_call.1} parent=55 // pred_fallthru
          _
      $region56: #{tpu_custom_call.1} parent=5 // pred_fallthru
        _
    $region6: #{tpu_custom_call.1} parent=1 // loop_footer
      %s20 = sadd.s32 1, %s16
    $region7: #{tpu_custom_call.1} parent=1 // loop_footer_branch
      %15 = sbr.rel target = $region3
    $region8: #{tpu_custom_call.1} parent=1 // loop_exit
      _
    %724 = vsyncpa [#allocation5], 1
    %s725 = scalar_lea.sflag [#allocation5], 1
    %726 = vsyncpa %s725, 1
    %727 = vsyncpa [#allocation8], 1
    %728 = vsyncpa [#allocation6], 1
    %s729 = scalar_lea.sflag [#allocation6], 1
    %730 = vsyncpa %s729, 1

</llo_original>
